<compile_context>
chip_gen: v7x
topology: tpu7x:2x2x1
jax: 0.10.0
libtpu: 0.0.40
codegen_flags: <defaults>
</compile_context>

<pallas_src>
import jax
import jax.numpy as jnp
from jax.experimental import pallas as pl
from jax.experimental.pallas import tpu as pltpu


# ---------------------------------------------------------------------------
# Kernels
# ---------------------------------------------------------------------------

def _triplet_tile_losses(margin_ref, a_ref, p_ref, n_ref):
    """Per-tile positive/negative hinge terms as (tile, 1) f32 columns."""
    margin = margin_ref[0]

    a = a_ref[...].astype(jnp.float32)
    p = p_ref[...].astype(jnp.float32)
    n = n_ref[...].astype(jnp.float32)

    dp = a - p
    dn = a - n

    # L2 norms over the feature (lane) axis.
    pos_norm = jnp.sqrt(jnp.sum(dp * dp, axis=1, keepdims=True))  # (tile, 1)
    neg_norm = jnp.sqrt(jnp.sum(dn * dn, axis=1, keepdims=True))  # (tile, 1)

    pos_l = jnp.maximum(jnp.float32(1e-10), pos_norm)
    neg_l = jnp.maximum(jnp.float32(0.0), margin - neg_norm)
    return pos_l, neg_l


def _triplet_kernel_weighted(margin_ref, a_ref, p_ref, n_ref,
                             w_pos_ref, w_neg_ref, out_ref):
    pos_l, neg_l = _triplet_tile_losses(margin_ref, a_ref, p_ref, n_ref)
    out_ref[...] = pos_l * w_pos_ref[...] + neg_l * w_neg_ref[...]


def _triplet_kernel_unweighted(margin_ref, a_ref, p_ref, n_ref, out_ref):
    pos_l, neg_l = _triplet_tile_losses(margin_ref, a_ref, p_ref, n_ref)
    out_ref[...] = pos_l + neg_l


# ---------------------------------------------------------------------------
# Wrapper
# ---------------------------------------------------------------------------

def _vmem_capacity_bytes():
    try:
        return int(pltpu.get_tpu_info().vmem_capacity_bytes)
    except Exception:
        return 64 * 1024 * 1024  # conservative fallback (v7x-sized)


def _pick_batch_tile(pass_size, dim, itemsize, vmem_cap):
    """Largest batch tile that divides pass_size, keeps the sublane axis
    aligned for the input dtype, and keeps 3 inputs x 2 pipeline buffers well
    inside this generation's VMEM budget."""
    sub = 8 * max(1, 4 // max(1, itemsize))        # 8 (f32) / 16 (bf16) / 32 (int8)
    budget = vmem_cap // 32                        # bytes per single input block
    max_rows = max(sub, budget // max(1, dim * itemsize))
    if pass_size <= max_rows:
        return pass_size                           # one block == full pass (legal)
    t = (max_rows // sub) * sub
    while t >= sub:
        if pass_size % t == 0:
            return t
        t -= sub
    return pass_size                               # no aligned divisor: single block


def _share_index_map(share):
    def index_map(i):
        return (share, i, 0)
    return index_map


def _col_index_map(i):
    return (i, 0)


def triplet_loss(features, labels=None, margin=10.0, weight=None, split=None,
                 reduce='mean'):
    """JAX/Pallas equivalent of TripletLoss.forward.

    features: [bsz, feature_dim] with bsz divisible by 3 (anchor/pos/neg shares).
    """
    del labels, split  # unused in the reference forward pass
    features = jnp.asarray(features)
    bsz, dim = features.shape
    assert bsz >= 3 and bsz % 3 == 0, "TripletLoss expects bsz divisible by 3"
    pass_size = bsz // 3

    # Free (bitcast) reshape: share s occupies rows [s*pass, (s+1)*pass).
    # Passing this SAME array three times with different index_maps avoids
    # materializing anchor/positive/negative copies in HBM.
    feats3 = features.reshape(3, pass_size, dim)

    itemsize = jnp.dtype(features.dtype).itemsize
    vmem_cap = _vmem_capacity_bytes()
    tile_b = _pick_batch_tile(pass_size, dim, itemsize, vmem_cap)
    num_tiles = pass_size // tile_b

    margin_arr = jnp.full((1,), margin, dtype=jnp.float32)

    feat_block = (None, tile_b, dim)               # leading share dim squeezed
    col_spec = pl.BlockSpec((tile_b, 1), _col_index_map)

    in_specs = [
        pl.BlockSpec(memory_space=pltpu.MemorySpace.SMEM),       # margin
        pl.BlockSpec(feat_block, _share_index_map(0)),           # anchor
        pl.BlockSpec(feat_block, _share_index_map(1)),           # positive
        pl.BlockSpec(feat_block, _share_index_map(2)),           # negative
    ]
    args = [margin_arr, feats3, feats3, feats3]

    if weight is not None:
        weight = jnp.asarray(weight, jnp.float32)
        aw = weight[:pass_size]
        pw = weight[pass_size:2 * pass_size]
        nw = weight[2 * pass_size:3 * pass_size]
        # Fold the weight products once in the wrapper (tiny O(pass) ops):
        # loss = pos * (aw*pw) + neg * (pw*nw).
        w_pos = (aw * pw).reshape(pass_size, 1)
        w_neg = (pw * nw).reshape(pass_size, 1)
        in_specs += [col_spec, col_spec]
        args += [w_pos, w_neg]
        kernel = _triplet_kernel_weighted
    else:
        kernel = _triplet_kernel_unweighted

    per_sample = pl.pallas_call(
        kernel,
        out_shape=jax.ShapeDtypeStruct((pass_size, 1), jnp.float32),
        grid=(num_tiles,),
        in_specs=in_specs,
        out_specs=col_spec,
        compiler_params=pltpu.CompilerParams(
            dimension_semantics=("parallel",),
            vmem_limit_bytes=int(min(vmem_cap // 2, 64 * 1024 * 1024)),
        ),
    )(*args)

    if reduce == 'mean':
        return jnp.mean(per_sample)
    return per_sample[:, 0]


# ---------------------------------------------------------------------------
# Pure-JAX reference (mirrors the PyTorch semantics) + demo
# ---------------------------------------------------------------------------

def _reference_triplet_loss(features, margin=10.0, weight=None, reduce='mean'):
    bsz = features.shape[0]
    pass_size = bsz // 3
    anchor = features[:pass_size]
    positive = features[pass_size:2 * pass_size]
    negative = features[2 * pass_size:3 * pass_size]
    pos = jnp.maximum(1e-10, jnp.linalg.norm(anchor - positive, ord=2, axis=1))
    neg = jnp.maximum(0.0, margin - jnp.linalg.norm(anchor - negative, ord=2, axis=1))
    if weight is not None:
        aw = weight[:pass_size]
        pw = weight[pass_size:2 * pass_size]
        nw = weight[2 * pass_size:3 * pass_size]
        pos = pos * aw * pw
        neg = neg * pw * nw
    loss = pos + neg
    if reduce == 'mean':
        loss = loss.mean()
    return loss


if __name__ == "__main__":
    key = jax.random.PRNGKey(0)
    k_feat, k_w = jax.random.split(key)

    bsz, feature_dim = 12, 32  # bsz divisible by 3 -> pass_size = 4
    features = jax.random.normal(k_feat, (bsz, feature_dim), dtype=jnp.float32)
    weight = jax.random.uniform(k_w, (bsz,), dtype=jnp.float32) + 0.5

    # reduce='mean', no weight
    out_mean = jax.block_until_ready(triplet_loss(features, margin=10.0))
    ref_mean = _reference_triplet_loss(features, margin=10.0)
    assert jnp.allclose(out_mean, ref_mean, rtol=1e-5, atol=1e-5), (out_mean, ref_mean)

    # reduce=False (per-sample), with weights
    out_ps = jax.block_until_ready(
        triplet_loss(features, margin=10.0, weight=weight, reduce=False))
    ref_ps = _reference_triplet_loss(features, margin=10.0, weight=weight,
                                     reduce=False)
    assert jnp.allclose(out_ps, ref_ps, rtol=1e-5, atol=1e-5), (out_ps, ref_ps)

    # native bf16 load path (upcast happens inside the kernel)
    feats_bf16 = features.astype(jnp.bfloat16)
    out_bf16 = jax.block_until_ready(triplet_loss(feats_bf16, margin=10.0))
    ref_bf16 = _reference_triplet_loss(feats_bf16.astype(jnp.float32), margin=10.0)
    assert jnp.allclose(out_bf16, ref_bf16, rtol=1e-4, atol=1e-4), (out_bf16, ref_bf16)

    print("KERNEL_OK")
</pallas_src>

<mosaic_0001>
module attributes {stable_mosaic.version = 11 : i64} {
  func.func @_triplet_kernel_unweighted(%arg0: i32, %arg1: memref<1xf32, #tpu.memory_space<smem>>, %arg2: memref<1x4x32xf32, #tpu.memory_space<vmem>>, %arg3: memref<1x4x32xf32, #tpu.memory_space<vmem>>, %arg4: memref<1x4x32xf32, #tpu.memory_space<vmem>>, %arg5: memref<4x1xf32, #tpu.memory_space<vmem>>) attributes {dimension_semantics = [#tpu.dimension_semantics<parallel>], iteration_bounds = array<i64: 1>, scalar_prefetch = 0 : i64, scratch_operands = 0 : i64, tpu.core_type = #tpu.core_type<tc>, window_params = [{transform_indices = @transform_0, window_bounds = array<i64: 1>}, {transform_indices = @transform_1, window_bounds = array<i64: 1, 4, 32>}, {transform_indices = @transform_2, window_bounds = array<i64: 1, 4, 32>}, {transform_indices = @transform_3, window_bounds = array<i64: 1, 4, 32>}, {transform_indices = @transform_4, window_bounds = array<i64: 4, 1>}]} {
    %c0 = arith.constant 0 : index
    %0 = memref.load %arg1[%c0] : memref<1xf32, #tpu.memory_space<smem>>
    %c0_0 = arith.constant 0 : index
    %c0_1 = arith.constant 0 : index
    %c0_2 = arith.constant 0 : index
    %1 = vector.load %arg2[%c0_0, %c0_1, %c0_2] : memref<1x4x32xf32, #tpu.memory_space<vmem>>, vector<1x4x32xf32>
    %2 = vector.shape_cast %1 : vector<1x4x32xf32> to vector<4x32xf32>
    %c0_3 = arith.constant 0 : index
    %c0_4 = arith.constant 0 : index
    %c0_5 = arith.constant 0 : index
    %3 = vector.load %arg3[%c0_3, %c0_4, %c0_5] : memref<1x4x32xf32, #tpu.memory_space<vmem>>, vector<1x4x32xf32>
    %4 = vector.shape_cast %3 : vector<1x4x32xf32> to vector<4x32xf32>
    %c0_6 = arith.constant 0 : index
    %c0_7 = arith.constant 0 : index
    %c0_8 = arith.constant 0 : index
    %5 = vector.load %arg4[%c0_6, %c0_7, %c0_8] : memref<1x4x32xf32, #tpu.memory_space<vmem>>, vector<1x4x32xf32>
    %6 = vector.shape_cast %5 : vector<1x4x32xf32> to vector<4x32xf32>
    %7 = arith.subf %2, %4 : vector<4x32xf32>
    %8 = arith.subf %2, %6 : vector<4x32xf32>
    %9 = arith.mulf %7, %7 : vector<4x32xf32>
    %cst = arith.constant dense<0.000000e+00> : vector<4xf32>
    %10 = vector.multi_reduction <add>, %9, %cst [1] : vector<4x32xf32> to vector<4xf32>
    %11 = vector.shape_cast %10 : vector<4xf32> to vector<4x1xf32>
    %12 = math.sqrt %11 : vector<4x1xf32>
    %13 = arith.mulf %8, %8 : vector<4x32xf32>
    %cst_9 = arith.constant dense<0.000000e+00> : vector<4xf32>
    %14 = vector.multi_reduction <add>, %13, %cst_9 [1] : vector<4x32xf32> to vector<4xf32>
    %15 = vector.shape_cast %14 : vector<4xf32> to vector<4x1xf32>
    %16 = math.sqrt %15 : vector<4x1xf32>
    %cst_10 = arith.constant 1.000000e-10 : f32
    %17 = vector.broadcast %cst_10 : f32 to vector<4x1xf32>
    %18 = arith.maximumf %17, %12 : vector<4x1xf32>
    %19 = vector.broadcast %0 : f32 to vector<4x1xf32>
    %20 = arith.subf %19, %16 : vector<4x1xf32>
    %cst_11 = arith.constant 0.000000e+00 : f32
    %21 = vector.broadcast %cst_11 : f32 to vector<4x1xf32>
    %22 = arith.maximumf %21, %20 : vector<4x1xf32>
    %23 = arith.addf %18, %22 : vector<4x1xf32>
    %c0_12 = arith.constant 0 : index
    %c0_13 = arith.constant 0 : index
    %24 = vector.load %arg5[%c0_12, %c0_13] : memref<4x1xf32, #tpu.memory_space<vmem>>, vector<4x1xf32>
    tpu.vector_store %arg5[%c0_12, %c0_13], %23 {strides = array<i32>} : memref<4x1xf32, #tpu.memory_space<vmem>>, vector<4x1xf32>,
    return
  }
  func.func @transform_0(%arg0: i32) -> i32 {
    %c0_i32 = arith.constant 0 : i32
    %c0_i32_0 = arith.constant 0 : i32
    return %c0_i32 : i32
  }
  func.func @transform_1(%arg0: i32) -> (i32, i32, i32) {
    %c0_i32 = arith.constant 0 : i32
    %c0_i32_0 = arith.constant 0 : i32
    %c0_i32_1 = arith.constant 0 : i32
    return %c0_i32, %arg0, %c0_i32_0 : i32, i32, i32
  }
  func.func @transform_2(%arg0: i32) -> (i32, i32, i32) {
    %c1_i32 = arith.constant 1 : i32
    %c0_i32 = arith.constant 0 : i32
    %c0_i32_0 = arith.constant 0 : i32
    return %c1_i32, %arg0, %c0_i32 : i32, i32, i32
  }
  func.func @transform_3(%arg0: i32) -> (i32, i32, i32) {
    %c2_i32 = arith.constant 2 : i32
    %c0_i32 = arith.constant 0 : i32
    %c0_i32_0 = arith.constant 0 : i32
    return %c2_i32, %arg0, %c0_i32 : i32, i32, i32
  }
  func.func @transform_4(%arg0: i32) -> (i32, i32) {
    %c0_i32 = arith.constant 0 : i32
    %c0_i32_0 = arith.constant 0 : i32
    return %arg0, %c0_i32 : i32, i32
  }
}

</mosaic_0001>

<llo_original>
// kernel: tpu_custom_call.1
$region0: #{tpu_custom_call.1}
  #allocation0 [shape = 'u32[]', space=smem, size = 0x4, offset = 0x4, fixed_abs, tag = 'smem constant byte address 0x4 - core index']
  #allocation1 [shape = 'u32[144,128]{1,0:T(1,128)}', space=vmem, size = 0x12000, scoped, tag = 'internal scratch']
  #allocation2 [shape = 'f32[1]{0:T(128)S(6)}', space=smem, size = 0x200, scoped, tag = 'scoped memory for tpu_custom_call.1']
  %s0 = inlined_call_operand.<no memory space> [shape: f32[1], index: 0, kind: input, shape index: {}]
  %s1 = inlined_call_operand.hbm [shape: f32[3,4,32], index: 1, kind: input, shape index: {}]
  %s2 = inlined_call_operand.hbm [shape: f32[3,4,32], index: 2, kind: input, shape index: {}]
  %s3 = inlined_call_operand.hbm [shape: f32[3,4,32], index: 3, kind: input, shape index: {}]
  %s4 = inlined_call_operand.vmem [shape: f32[4,1], index: 4, kind: output, shape index: {}]
  %s5 = sld [smem:[#allocation0]]
  $region38: #{tpu_custom_call.1} parent=0
    _
  %s7 = ssub.s32 1, %s5
  %s8 = scalar_select 0, %s7, %s5
  %9 = sst [smem:[#allocation2]] %s0
  $region1: #{tpu_custom_call.1} parent=0
    #allocation3 [shape = 'u8[2048]{0}', space=vmem, size = 0x800, scoped, tag = 'input window, operand 1, single buffered']
    #allocation4 [shape = 's32[1]{0}', space=sflag, size = 0x4, scoped, tag = 'scoped memory for tpu_custom_call.1']
    #allocation5 [shape = 'u8[2048]{0}', space=vmem, size = 0x800, scoped, tag = 'input window, operand 2, single buffered']
    #allocation6 [shape = 's32[1]{0}', space=sflag, size = 0x4, scoped, tag = 'scoped memory for tpu_custom_call.1']
    #allocation7 [shape = 'u8[2048]{0}', space=vmem, size = 0x800, scoped, tag = 'input window, operand 3, single buffered']
    %10 = vsyncpa [#allocation4], 0
    %11 = vsyncpa [#allocation6], 0
    // Predicated region
    $region2: #{tpu_custom_call.1} parent=1 // pred_check
      _
    $region3: #{tpu_custom_call.1} parent=1 // pred_check_branch
      %13 = sbr.rel (0) target = $region5
    $region4: #{tpu_custom_call.1} parent=1 // pred_region
      _
    $region5: #{tpu_custom_call.1} parent=1 // pred_fallthru
      _
    // Predicated region
    $region6: #{tpu_custom_call.1} parent=1 // pred_check
      _
    $region7: #{tpu_custom_call.1} parent=1 // pred_check_branch
      %15 = sbr.rel (0) target = $region9
    $region8: #{tpu_custom_call.1} parent=1 // pred_region
      %s17 = ssub.s32 64, 64
      %18 = vsyncadd [#allocation4], %s17
      %s20 = sshll.u32 [#allocation3], 4
      %s21 = int_to_ptr.vmem [resolvable:$true] %s20
      %23 = dma.hbm_to_vmem [thread:$0]  %s1, 64, %s21, [#allocation4]
    $region9: #{tpu_custom_call.1} parent=1 // pred_fallthru
      _
    // Predicated region
    $region10: #{tpu_custom_call.1} parent=1 // pred_check
      _
    $region11: #{tpu_custom_call.1} parent=1 // pred_check_branch
      %25 = sbr.rel (0) target = $region13
    $region12: #{tpu_custom_call.1} parent=1 // pred_region
      %s27 = ssub.s32 64, 64
      %28 = vsyncadd [#allocation6], %s27
      %s29 = scalar_lea.hbm %s2, 64
      %s31 = sshll.u32 [#allocation5], 4
      %s32 = int_to_ptr.vmem [resolvable:$true] %s31
      %34 = dma.hbm_to_vmem [thread:$0]  %s29, 64, %s32, [#allocation6]
    $region13: #{tpu_custom_call.1} parent=1 // pred_fallthru
      _
    // Predicated region
    $region14: #{tpu_custom_call.1} parent=1 // pred_check
      _
    $region15: #{tpu_custom_call.1} parent=1 // pred_check_branch
      %36 = sbr.rel (0) target = $region17
    $region16: #{tpu_custom_call.1} parent=1 // pred_region
      %s38 = ssub.s32 64, 64
      %39 = vsyncadd [#allocation6], %s38
      %s40 = scalar_lea.hbm %s3, 128
      %s42 = sshll.u32 [#allocation7], 4
      %s43 = int_to_ptr.vmem [resolvable:$true] %s42
      %45 = dma.hbm_to_vmem [thread:$0]  %s40, 64, %s43, [#allocation6]
    $region17: #{tpu_custom_call.1} parent=1 // pred_fallthru
      _
    // Predicated region
    $region18: #{tpu_custom_call.1} parent=1 // pred_check
      _
    $region19: #{tpu_custom_call.1} parent=1 // pred_check_branch
      %47 = sbr.rel (0) target = $region21
    $region20: #{tpu_custom_call.1} parent=1 // pred_region
      %48 = dma.done [#allocation4], 64
    $region21: #{tpu_custom_call.1} parent=1 // pred_fallthru
      _
    // Predicated region
    $region22: #{tpu_custom_call.1} parent=1 // pred_check
      _
    $region23: #{tpu_custom_call.1} parent=1 // pred_check_branch
      %50 = sbr.rel (0) target = $region25
    $region24: #{tpu_custom_call.1} parent=1 // pred_region
      %51 = dma.done [#allocation6], 64
    $region25: #{tpu_custom_call.1} parent=1 // pred_fallthru
      _
    // Predicated region
    $region26: #{tpu_custom_call.1} parent=1 // pred_check
      _
    $region27: #{tpu_custom_call.1} parent=1 // pred_check_branch
      %53 = sbr.rel (0) target = $region29
    $region28: #{tpu_custom_call.1} parent=1 // pred_region
      %54 = dma.done [#allocation6], 64
    $region29: #{tpu_custom_call.1} parent=1 // pred_fallthru
      _
    %s55 = sld [smem:[#allocation2]]
    %v56 = vld [vmem:[#allocation3] sm:$0xf]
    %v57 = vld [vmem:[#allocation5] sm:$0xf]
    %v58 = vld [vmem:[#allocation7] sm:$0xf]
    %v59 = vsub.f32 %v56, %v57
    %v60 = vsub.f32 %v56, %v58
    %v61 = vmul.f32 %v59, %v59
    %vm62 = vcmask 257024
    %v63 = vsel %vm62, %v61, 0.0
    %64 = vadd.xlane.f32.xlu0 %v63
    %v65 = vpop.xlane.xlu0 %64
    %v66 = vrsqrt.pop %v65
    %v67 = vmul.f32 %v65, %v66
    %vm68 = vcmp.eq.f32.partialorder %v65, inf
    %v69 = vsel %vm68, %v65, %v67
    %vm70 = vcmp.eq.f32.partialorder %v65, 0.0
    %v71 = vand.u32 %v65, 2147483648
    %v72 = vsel %vm70, %v71, %v69
    %v73 = vmul.f32 %v60, %v60
    %v74 = vsel %vm62, %v73, 0.0
    %75 = vadd.xlane.f32.xlu0 %v74
    %v76 = vpop.xlane.xlu0 %75
    %v77 = vrsqrt.pop %v76
    %v78 = vmul.f32 %v76, %v77
    %vm79 = vcmp.eq.f32.partialorder %v76, inf
    %v80 = vsel %vm79, %v76, %v78
    %vm81 = vcmp.eq.f32.partialorder %v76, 0.0
    %v82 = vand.u32 %v76, 2147483648
    %v83 = vsel %vm81, %v82, %v80
    %v84 = vmax.f32 %v72, 1e-10
    %v85 = vstv %s55
    %v86 = vsub.f32 %v85, %v83
    %v87 = vmax.f32 %v86, 0.0
    %v88 = vadd.f32 %v84, %v87
    %vm89 = vcmask 3072
    %90 = vst.msk [vmem:[%s4] sm:$0xf] %vm89, %v88
    // Predicated region
    $region30: #{tpu_custom_call.1} parent=1 // pred_check
      _
    $region31: #{tpu_custom_call.1} parent=1 // pred_check_branch
      %92 = sbr.rel (0) target = $region33
    $region32: #{tpu_custom_call.1} parent=1 // pred_region
      _
    $region33: #{tpu_custom_call.1} parent=1 // pred_fallthru
      _
    // Predicated region
    $region34: #{tpu_custom_call.1} parent=1 // pred_check
      _
    $region35: #{tpu_custom_call.1} parent=1 // pred_check_branch
      %94 = sbr.rel (0) target = $region37
    $region36: #{tpu_custom_call.1} parent=1 // pred_region
      _
    $region37: #{tpu_custom_call.1} parent=1 // pred_fallthru
      _
    %95 = vsyncpa [#allocation4], 1
    %96 = vsyncpa [#allocation6], 1

</llo_original>
